<compile_context>
chip_gen: v7x
topology: tpu7x:2x2x1
jax: 0.10.0
libtpu: 0.0.40
codegen_flags: <defaults>
</compile_context>

<pallas_src>
import jax
import jax.numpy as jnp
from jax.experimental import pallas as pl
from jax.experimental.pallas import tpu as pltpu


def encoder_head_kernel(feat_ref, global_ref):
    # feat_ref: (Bt, HW, C) -- channels (2048) lane-dense, spatial positions
    # on sublanes.  Compute AvgPool2d over all HW positions per image as a
    # sublane-axis sum with f32 accumulation.
    x = feat_ref[...]                                           # (Bt, HW, C)
    hw = x.shape[1]
    pooled = jnp.sum(x.astype(jnp.float32), axis=1, keepdims=True) * (1.0 / hw)
    global_ref[...] = pooled.astype(global_ref.dtype)           # (Bt, 1, C)


def _pick_batch_tile(batch, max_bt=16):
    """Largest divisor of `batch` <= max_bt, preferring >= 2 grid steps so the
    parallel batch axis can be sharded across v7x's two TensorCores."""
    candidates = [bt for bt in range(1, min(batch, max_bt) + 1) if batch % bt == 0]
    multi_step = [bt for bt in candidates if batch // bt >= 2]
    return max(multi_step) if multi_step else max(candidates)


def resnet152_encoder_head(features, *, max_batch_tile=16):
    """features: (B, C, H, W) backbone output.

    Returns (global_features (B, C), spatial_features (B, H*W, C)),
    matching Resnet152_Encoder.forward on the backbone feature map.
    """
    B, C, H, W = features.shape
    HW = H * W

    # NCHW -> (B, HW, C): single layout pass so channels (2048) sit on the
    # lane axis.  This array *is* spatial_features (a pure permute of the
    # backbone output), so it is returned directly rather than copied through
    # the kernel.
    spatial = jnp.transpose(features, (0, 2, 3, 1)).reshape(B, HW, C)

    bt = _pick_batch_tile(B, max_batch_tile)
    grid = (B // bt,)

    global3 = pl.pallas_call(
        encoder_head_kernel,
        out_shape=jax.ShapeDtypeStruct((B, 1, C), features.dtype),
        grid=grid,
        in_specs=[pl.BlockSpec((bt, HW, C), lambda b: (b, 0, 0))],
        out_specs=pl.BlockSpec((bt, 1, C), lambda b: (b, 0, 0)),
        compiler_params=pltpu.CompilerParams(
            dimension_semantics=("parallel",)),
    )(spatial)

    return global3.reshape(B, C), spatial


def reference_forward(features):
    """Pure-JAX reference matching the PyTorch module (post-backbone)."""
    B, C, H, W = features.shape
    global_features = jnp.mean(features, axis=(2, 3))            # AvgPool2d(7).view(B,-1)
    spatial_features = jnp.transpose(features, (0, 2, 3, 1)).reshape(B, H * W, C)
    return global_features, spatial_features


if __name__ == "__main__":
    # TODO(synk): the pretrained ResNet-152 conv stack (torchvision weights
    # read from disk, frozen) is not translated to Pallas; we feed synthetic
    # backbone feature maps with the shape the backbone produces for 224x224
    # images.
    B, C, H, W = 2, 2048, 7, 7

    key = jax.random.PRNGKey(0)
    features = jax.random.normal(key, (B, C, H, W), jnp.float32)

    global_features, spatial_features = resnet152_encoder_head(features)
    jax.block_until_ready((global_features, spatial_features))

    g_ref, s_ref = reference_forward(features)
    assert global_features.shape == (B, C)
    assert spatial_features.shape == (B, H * W, C)
    assert jnp.allclose(global_features, g_ref, atol=1e-5, rtol=1e-5)
    assert jnp.allclose(spatial_features, s_ref, atol=1e-5, rtol=1e-5)

    print("KERNEL_OK")
</pallas_src>

<mosaic_0001>
module attributes {stable_mosaic.version = 11 : i64} {
  func.func @encoder_head_kernel(%arg0: i32, %arg1: memref<1x49x2048xf32, #tpu.memory_space<vmem>>, %arg2: memref<1x1x2048xf32, #tpu.memory_space<vmem>>) attributes {dimension_semantics = [#tpu.dimension_semantics<parallel>], iteration_bounds = array<i64: 2>, scalar_prefetch = 0 : i64, scratch_operands = 0 : i64, tpu.core_type = #tpu.core_type<tc>, window_params = [{transform_indices = @transform_0, window_bounds = array<i64: 1, 49, 2048>}, {transform_indices = @transform_1, window_bounds = array<i64: 1, 1, 2048>}]} {
    %c0 = arith.constant 0 : index
    %c0_0 = arith.constant 0 : index
    %c0_1 = arith.constant 0 : index
    %0 = vector.load %arg1[%c0, %c0_0, %c0_1] : memref<1x49x2048xf32, #tpu.memory_space<vmem>>, vector<1x49x2048xf32>
    %cst = arith.constant dense<0.000000e+00> : vector<1x2048xf32>
    %1 = vector.multi_reduction <add>, %0, %cst [1] : vector<1x49x2048xf32> to vector<1x2048xf32>
    %2 = vector.shape_cast %1 : vector<1x2048xf32> to vector<1x1x2048xf32>
    %cst_2 = arith.constant 0.0204081628 : f32
    %3 = vector.broadcast %cst_2 : f32 to vector<1x1x2048xf32>
    %4 = arith.mulf %2, %3 : vector<1x1x2048xf32>
    %c0_3 = arith.constant 0 : index
    %c0_4 = arith.constant 0 : index
    %c0_5 = arith.constant 0 : index
    %5 = vector.load %arg2[%c0_3, %c0_4, %c0_5] : memref<1x1x2048xf32, #tpu.memory_space<vmem>>, vector<1x1x2048xf32>
    tpu.vector_store %arg2[%c0_3, %c0_4, %c0_5], %4 {strides = array<i32>} : memref<1x1x2048xf32, #tpu.memory_space<vmem>>, vector<1x1x2048xf32>,
    return
  }
  func.func @transform_0(%arg0: i32) -> (i32, i32, i32) {
    %c0_i32 = arith.constant 0 : i32
    %c0_i32_0 = arith.constant 0 : i32
    %c0_i32_1 = arith.constant 0 : i32
    return %arg0, %c0_i32, %c0_i32_0 : i32, i32, i32
  }
  func.func @transform_1(%arg0: i32) -> (i32, i32, i32) {
    %c0_i32 = arith.constant 0 : i32
    %c0_i32_0 = arith.constant 0 : i32
    %c0_i32_1 = arith.constant 0 : i32
    return %arg0, %c0_i32, %c0_i32_0 : i32, i32, i32
  }
}

</mosaic_0001>

<llo_original>
// kernel: tpu_custom_call.1
$region0: #{tpu_custom_call.1}
  #allocation0 [shape = 'u32[]', space=smem, size = 0x4, offset = 0x4, fixed_abs, tag = 'smem constant byte address 0x4 - core index']
  #allocation1 [shape = 'u32[144,128]{1,0:T(1,128)}', space=vmem, size = 0x12000, scoped, tag = 'internal scratch']
  %s0 = inlined_call_operand.vmem [shape: f32[2,49,2048], index: 0, kind: input, shape index: {}]
  %s1 = inlined_call_operand.hbm [shape: f32[2,1,2048], index: 1, kind: output, shape index: {}]
  %s2 = sld [smem:[#allocation0]]
  $region37: #{tpu_custom_call.1} parent=0
    _
  %s4 = ssub.s32 1, %s2
  %s5 = scalar_select 0, %s4, %s2
  $region1: #{tpu_custom_call.1} parent=0
    #allocation2 [shape = 'u8[16384]{0}', space=vmem, size = 0x4000, scoped, tag = 'output window, operand 0']
    #allocation3 [shape = 's32[2]{0}', space=sflag, size = 0x8, scoped, tag = 'scoped memory for tpu_custom_call.1']
    %6 = vsyncpa [#allocation3], 0
    %s7 = scalar_lea.sflag [#allocation3], 1
    %8 = vsyncpa %s7, 0
    loop: start=0, step=1, limit=4
    $region2: #{tpu_custom_call.1} parent=1 // loop_pre_header
      _
    $region3: #{tpu_custom_call.1} parent=1 // loop_header
      %s10 = sphi 0, %s14
      %p11 = scmp.ge.s32.totalorder %s10, 4
      %s20 = sphi 0, %s22
      %s23 = sphi 0, %s20
      %s24 = sphi 0, %s23
      %s40 = sphi 0, %s24
      %s46 = sphi 0, %s48
      %s49 = sphi 0, %s46
      %s50 = sphi 0, %s49
      %s66 = sphi 0, %s50
    $region4: #{tpu_custom_call.1} parent=1 // loop_header_branch
      %13 = sbr.rel (%p11) target = $region8
    $region5: #{tpu_custom_call.1} parent=1 // loop_body
      %s15 = ssub.s32 %s10, 1
      %s16 = ssub.s32 %s10, 2
      %s17 = sadd.s32 %s10, 1
      %s18 = ssub.s32 %s10, %s17
      %p19 = scmp.eq.s32.totalorder %s18, 0
      %s21 = sadd.s32 %s20, 1
      %s22 = scalar_select %p19, %s20, %s21
      %p25 = pneg %p19
      %p26 = scmp.eq.s32.totalorder %s10, 1
      %p27 = por %p25, %p26
      %p28 = scmp.ne.s32.totalorder %s20, %s23
      %p29 = scmp.eq.s32.totalorder %s10, 0
      %p30 = por %p28, %p29
      %p31 = scmp.ne.s32.totalorder %s20, %s23
      %p32 = scmp.eq.s32.totalorder %s15, 1
      %p33 = por %p31, %p32
      %p34 = scmp.ne.s32.totalorder %s23, %s24
      %p35 = scmp.eq.s32.totalorder %s15, 0
      %p36 = por %p34, %p35
      %p37 = scmp.ne.s32.totalorder %s23, %s24
      %p38 = scmp.eq.s32.totalorder %s16, 1
      %p39 = por %p37, %p38
      %p41 = scmp.ne.s32.totalorder %s24, %s40
      %p42 = scmp.eq.s32.totalorder %s16, 0
      %p43 = por %p41, %p42
      %s44 = ssub.s32 %s10, %s17
      %p45 = scmp.eq.s32.totalorder %s44, 0
      %s47 = sadd.s32 %s46, 1
      %s48 = scalar_select %p45, %s46, %s47
      %p51 = pneg %p45
      %p52 = scmp.eq.s32.totalorder %s10, 1
      %p53 = por %p51, %p52
      %p54 = scmp.ne.s32.totalorder %s46, %s49
      %p55 = scmp.eq.s32.totalorder %s10, 0
      %p56 = por %p54, %p55
      %p57 = scmp.ne.s32.totalorder %s46, %s49
      %p58 = scmp.eq.s32.totalorder %s15, 1
      %p59 = por %p57, %p58
      %p60 = scmp.ne.s32.totalorder %s49, %s50
      %p61 = scmp.eq.s32.totalorder %s15, 0
      %p62 = por %p60, %p61
      %p63 = scmp.ne.s32.totalorder %s49, %s50
      %p64 = scmp.eq.s32.totalorder %s16, 1
      %p65 = por %p63, %p64
      %p67 = scmp.ne.s32.totalorder %s50, %s66
      %p68 = scmp.eq.s32.totalorder %s16, 0
      %p69 = por %p67, %p68
      %p70 = scmp.le.s32.totalorder 1, %s10
      %p71 = scmp.lt.s32.totalorder %s10, 3
      %p72 = pnand %p70, %p71
      %p73 = pneg %p72
      // Predicated region
      $region9: #{tpu_custom_call.1} parent=5 // pred_check
        _
      $region10: #{tpu_custom_call.1} parent=5 // pred_check_branch
        %75 = sbr.rel (%p72) target = $region12
      $region11: #{tpu_custom_call.1} parent=5 // pred_region
        %s76 = ssub.s32 %s10, 1
      $region12: #{tpu_custom_call.1} parent=5 // pred_fallthru
        _
      %p77 = scmp.lt.s32.totalorder %s10, 2
      // Predicated region
      $region13: #{tpu_custom_call.1} parent=5 // pred_check
        %p78 = pneg %p77
      $region14: #{tpu_custom_call.1} parent=5 // pred_check_branch
        %80 = sbr.rel (%p78) target = $region16
      $region15: #{tpu_custom_call.1} parent=5 // pred_region
        // Predicated region
        $region17: #{tpu_custom_call.1} parent=15 // pred_check
          %p81 = pneg %p30
        $region18: #{tpu_custom_call.1} parent=15 // pred_check_branch
          %83 = sbr.rel (%p81) target = $region20
        $region19: #{tpu_custom_call.1} parent=15 // pred_region
          %p84 = scmp.lt.s32.totalorder %s10, 1
          %s85 = scalar_select %p84, %s10, 1
          %s86 = smul.addr %s85, 112
          %s87 = smul.addr %s86, 8
          %s88 = scalar_lea.vmem %s0, %s87
        $region20: #{tpu_custom_call.1} parent=15 // pred_fallthru
          _
      $region16: #{tpu_custom_call.1} parent=5 // pred_fallthru
        _
      %p89 = scmp.le.s32.totalorder 1, %s10
      %p90 = scmp.lt.s32.totalorder %s10, 3
      %p91 = pnand %p89, %p90
      %p92 = pneg %p91
      // Predicated region
      $region21: #{tpu_custom_call.1} parent=5 // pred_check
        _
      $region22: #{tpu_custom_call.1} parent=5 // pred_check_branch
        %94 = sbr.rel (%p91) target = $region24
      $region23: #{tpu_custom_call.1} parent=5 // pred_region
        %s95 = ssub.s32 %s10, 1
        %p96 = scmp.lt.s32.totalorder %s15, 1
        %s97 = scalar_select %p96, %s15, 1
        %s98 = smul.addr %s97, 112
        %s99 = smul.addr %s98, 8
        %s100 = scalar_lea.vmem %s0, %s99
        %p101 = pneg %p36
        %p102 = pneg %p33
        %p103 = pneg %p62
        %p104 = pneg %p59
        %s105 = sand.u32 %s49, 1
        %s106 = scalar_lea.sflag [#allocation3], %s105
        %s107 = sand.u32 %s49, 1
        %s108 = smul.addr %s107, 16
        %s109 = scalar_lea.vmem [#allocation2], %s108
        %p110 = scmp.lt.s32.totalorder %s15, 1
        %s111 = scalar_select %p110, %s15, 1
        %s112 = smul.addr %s111, 112
        %s113 = smul.addr %s112, 8
        %s114 = scalar_lea.vmem %s0, %s113
        %v115 = vld [vmem:[%s114] sm:$0xff]
        %v116 = vld [vmem:[%s114 + $0x8] sm:$0xff]
        %v117 = vld [vmem:[%s114 + $0x10] sm:$0xff]
        %v118 = vld [vmem:[%s114 + $0x18] sm:$0xff]
        %v119 = vld [vmem:[%s114 + $0x20] sm:$0xff]
        %v120 = vld [vmem:[%s114 + $0x28] sm:$0xff]
        %v121 = vld [vmem:[%s114 + $0x30] sm:$0xff]
        %v122 = vld [vmem:[%s114 + $0x38] sm:$0xff]
        %v123 = vld [vmem:[%s114 + $0x40] sm:$0xff]
        %v124 = vld [vmem:[%s114 + $0x48] sm:$0xff]
        %v125 = vld [vmem:[%s114 + $0x50] sm:$0xff]
        %v126 = vld [vmem:[%s114 + $0x58] sm:$0xff]
        %v127 = vld [vmem:[%s114 + $0x60] sm:$0xff]
        %v128 = vld [vmem:[%s114 + $0x68] sm:$0xff]
        %v129 = vld [vmem:[%s114 + $0x70] sm:$0xff]
        %v130 = vld [vmem:[%s114 + $0x78] sm:$0xff]
        %v131 = vld [vmem:[%s114 + $0x80] sm:$0xff]
        %v132 = vld [vmem:[%s114 + $0x88] sm:$0xff]
        %v133 = vld [vmem:[%s114 + $0x90] sm:$0xff]
        %v134 = vld [vmem:[%s114 + $0x98] sm:$0xff]
        %v135 = vld [vmem:[%s114 + $0xa0] sm:$0xff]
        %v136 = vld [vmem:[%s114 + $0xa8] sm:$0xff]
        %v137 = vld [vmem:[%s114 + $0xb0] sm:$0xff]
        %v138 = vld [vmem:[%s114 + $0xb8] sm:$0xff]
        %v139 = vld [vmem:[%s114 + $0xc0] sm:$0xff]
        %v140 = vld [vmem:[%s114 + $0xc8] sm:$0xff]
        %v141 = vld [vmem:[%s114 + $0xd0] sm:$0xff]
        %v142 = vld [vmem:[%s114 + $0xd8] sm:$0xff]
        %v143 = vld [vmem:[%s114 + $0xe0] sm:$0xff]
        %v144 = vld [vmem:[%s114 + $0xe8] sm:$0xff]
        %v145 = vld [vmem:[%s114 + $0xf0] sm:$0xff]
        %v146 = vld [vmem:[%s114 + $0xf8] sm:$0xff]
        %v147 = vld [vmem:[%s114 + $0x100] sm:$0xff]
        %v148 = vld [vmem:[%s114 + $0x108] sm:$0xff]
        %v149 = vld [vmem:[%s114 + $0x110] sm:$0xff]
        %v150 = vld [vmem:[%s114 + $0x118] sm:$0xff]
        %v151 = vld [vmem:[%s114 + $0x120] sm:$0xff]
        %v152 = vld [vmem:[%s114 + $0x128] sm:$0xff]
        %v153 = vld [vmem:[%s114 + $0x130] sm:$0xff]
        %v154 = vld [vmem:[%s114 + $0x138] sm:$0xff]
        %v155 = vld [vmem:[%s114 + $0x140] sm:$0xff]
        %v156 = vld [vmem:[%s114 + $0x148] sm:$0xff]
        %v157 = vld [vmem:[%s114 + $0x150] sm:$0xff]
        %v158 = vld [vmem:[%s114 + $0x158] sm:$0xff]
        %v159 = vld [vmem:[%s114 + $0x160] sm:$0xff]
        %v160 = vld [vmem:[%s114 + $0x168] sm:$0xff]
        %v161 = vld [vmem:[%s114 + $0x170] sm:$0xff]
        %v162 = vld [vmem:[%s114 + $0x178] sm:$0xff]
        %v163 = vld [vmem:[%s114 + $0x180] sm:$0xff]
        %v164 = vld [vmem:[%s114 + $0x188] sm:$0xff]
        %v165 = vld [vmem:[%s114 + $0x190] sm:$0xff]
        %v166 = vld [vmem:[%s114 + $0x198] sm:$0xff]
        %v167 = vld [vmem:[%s114 + $0x1a0] sm:$0xff]
        %v168 = vld [vmem:[%s114 + $0x1a8] sm:$0xff]
        %v169 = vld [vmem:[%s114 + $0x1b0] sm:$0xff]
        %v170 = vld [vmem:[%s114 + $0x1b8] sm:$0xff]
        %v171 = vld [vmem:[%s114 + $0x1c0] sm:$0xff]
        %v172 = vld [vmem:[%s114 + $0x1c8] sm:$0xff]
        %v173 = vld [vmem:[%s114 + $0x1d0] sm:$0xff]
        %v174 = vld [vmem:[%s114 + $0x1d8] sm:$0xff]
        %v175 = vld [vmem:[%s114 + $0x1e0] sm:$0xff]
        %v176 = vld [vmem:[%s114 + $0x1e8] sm:$0xff]
        %v177 = vld [vmem:[%s114 + $0x1f0] sm:$0xff]
        %v178 = vld [vmem:[%s114 + $0x1f8] sm:$0xff]
        %v179 = vld [vmem:[%s114 + $0x200] sm:$0xff]
        %v180 = vld [vmem:[%s114 + $0x208] sm:$0xff]
        %v181 = vld [vmem:[%s114 + $0x210] sm:$0xff]
        %v182 = vld [vmem:[%s114 + $0x218] sm:$0xff]
        %v183 = vld [vmem:[%s114 + $0x220] sm:$0xff]
        %v184 = vld [vmem:[%s114 + $0x228] sm:$0xff]
        %v185 = vld [vmem:[%s114 + $0x230] sm:$0xff]
        %v186 = vld [vmem:[%s114 + $0x238] sm:$0xff]
        %v187 = vld [vmem:[%s114 + $0x240] sm:$0xff]
        %v188 = vld [vmem:[%s114 + $0x248] sm:$0xff]
        %v189 = vld [vmem:[%s114 + $0x250] sm:$0xff]
        %v190 = vld [vmem:[%s114 + $0x258] sm:$0xff]
        %v191 = vld [vmem:[%s114 + $0x260] sm:$0xff]
        %v192 = vld [vmem:[%s114 + $0x268] sm:$0xff]
        %v193 = vld [vmem:[%s114 + $0x270] sm:$0xff]
        %v194 = vld [vmem:[%s114 + $0x278] sm:$0xff]
        %v195 = vld [vmem:[%s114 + $0x280] sm:$0xff]
        %v196 = vld [vmem:[%s114 + $0x288] sm:$0xff]
        %v197 = vld [vmem:[%s114 + $0x290] sm:$0xff]
        %v198 = vld [vmem:[%s114 + $0x298] sm:$0xff]
        %v199 = vld [vmem:[%s114 + $0x2a0] sm:$0xff]
        %v200 = vld [vmem:[%s114 + $0x2a8] sm:$0xff]
        %v201 = vld [vmem:[%s114 + $0x2b0] sm:$0xff]
        %v202 = vld [vmem:[%s114 + $0x2b8] sm:$0xff]
        %v203 = vld [vmem:[%s114 + $0x2c0] sm:$0xff]
        %v204 = vld [vmem:[%s114 + $0x2c8] sm:$0xff]
        %v205 = vld [vmem:[%s114 + $0x2d0] sm:$0xff]
        %v206 = vld [vmem:[%s114 + $0x2d8] sm:$0xff]
        %v207 = vld [vmem:[%s114 + $0x2e0] sm:$0xff]
        %v208 = vld [vmem:[%s114 + $0x2e8] sm:$0xff]
        %v209 = vld [vmem:[%s114 + $0x2f0] sm:$0xff]
        %v210 = vld [vmem:[%s114 + $0x2f8] sm:$0xff]
        %v211 = vld [vmem:[%s114 + $0x300] sm:$0x1]
        %v212 = vld [vmem:[%s114 + $0x308] sm:$0x1]
        %v213 = vld [vmem:[%s114 + $0x310] sm:$0x1]
        %v214 = vld [vmem:[%s114 + $0x318] sm:$0x1]
        %v215 = vld [vmem:[%s114 + $0x320] sm:$0x1]
        %v216 = vld [vmem:[%s114 + $0x328] sm:$0x1]
        %v217 = vld [vmem:[%s114 + $0x330] sm:$0x1]
        %v218 = vld [vmem:[%s114 + $0x338] sm:$0x1]
        %v219 = vld [vmem:[%s114 + $0x340] sm:$0x1]
        %v220 = vld [vmem:[%s114 + $0x348] sm:$0x1]
        %v221 = vld [vmem:[%s114 + $0x350] sm:$0x1]
        %v222 = vld [vmem:[%s114 + $0x358] sm:$0x1]
        %v223 = vld [vmem:[%s114 + $0x360] sm:$0x1]
        %v224 = vld [vmem:[%s114 + $0x368] sm:$0x1]
        %v225 = vld [vmem:[%s114 + $0x370] sm:$0x1]
        %v226 = vld [vmem:[%s114 + $0x378] sm:$0x1]
        %v227 = vadd.f32 %v115, %v131
        %v228 = vadd.f32 %v227, %v147
        %v229 = vadd.f32 %v228, %v163
        %v230 = vadd.f32 %v229, %v179
        %v231 = vadd.f32 %v230, %v195
        %vm232 = vcmask 1040384
        %v233 = vsel %vm232, %v211, 0.0
        %v234 = vadd.f32 %v231, %v233
        %v235 = vrot.slane %v234, 4
        %v236 = vadd.f32 %v234, %v235
        %v237 = vrot.slane %v236, 2
        %v238 = vadd.f32 %v236, %v237
        %v239 = vrot.slane %v238, 1
        %v240 = vadd.f32 %v238, %v239
        %v241 = vadd.f32 %v116, %v132
        %v242 = vadd.f32 %v241, %v148
        %v243 = vadd.f32 %v242, %v164
        %v244 = vadd.f32 %v243, %v180
        %v245 = vadd.f32 %v244, %v196
        %v246 = vsel %vm232, %v212, 0.0
        %v247 = vadd.f32 %v245, %v246
        %v248 = vrot.slane %v247, 4
        %v249 = vadd.f32 %v247, %v248
        %v250 = vrot.slane %v249, 2
        %v251 = vadd.f32 %v249, %v250
        %v252 = vrot.slane %v251, 1
        %v253 = vadd.f32 %v251, %v252
        %v254 = vadd.f32 %v117, %v133
        %v255 = vadd.f32 %v254, %v149
        %v256 = vadd.f32 %v255, %v165
        %v257 = vadd.f32 %v256, %v181
        %v258 = vadd.f32 %v257, %v197
        %v259 = vsel %vm232, %v213, 0.0
        %v260 = vadd.f32 %v258, %v259
        %v261 = vrot.slane %v260, 4
        %v262 = vadd.f32 %v260, %v261
        %v263 = vrot.slane %v262, 2
        %v264 = vadd.f32 %v262, %v263
        %v265 = vrot.slane %v264, 1
        %v266 = vadd.f32 %v264, %v265
        %v267 = vadd.f32 %v118, %v134
        %v268 = vadd.f32 %v267, %v150
        %v269 = vadd.f32 %v268, %v166
        %v270 = vadd.f32 %v269, %v182
        %v271 = vadd.f32 %v270, %v198
        %v272 = vsel %vm232, %v214, 0.0
        %v273 = vadd.f32 %v271, %v272
        %v274 = vrot.slane %v273, 4
        %v275 = vadd.f32 %v273, %v274
        %v276 = vrot.slane %v275, 2
        %v277 = vadd.f32 %v275, %v276
        %v278 = vrot.slane %v277, 1
        %v279 = vadd.f32 %v277, %v278
        %v280 = vadd.f32 %v119, %v135
        %v281 = vadd.f32 %v280, %v151
        %v282 = vadd.f32 %v281, %v167
        %v283 = vadd.f32 %v282, %v183
        %v284 = vadd.f32 %v283, %v199
        %v285 = vsel %vm232, %v215, 0.0
        %v286 = vadd.f32 %v284, %v285
        %v287 = vrot.slane %v286, 4
        %v288 = vadd.f32 %v286, %v287
        %v289 = vrot.slane %v288, 2
        %v290 = vadd.f32 %v288, %v289
        %v291 = vrot.slane %v290, 1
        %v292 = vadd.f32 %v290, %v291
        %v293 = vadd.f32 %v120, %v136
        %v294 = vadd.f32 %v293, %v152
        %v295 = vadd.f32 %v294, %v168
        %v296 = vadd.f32 %v295, %v184
        %v297 = vadd.f32 %v296, %v200
        %v298 = vsel %vm232, %v216, 0.0
        %v299 = vadd.f32 %v297, %v298
        %v300 = vrot.slane %v299, 4
        %v301 = vadd.f32 %v299, %v300
        %v302 = vrot.slane %v301, 2
        %v303 = vadd.f32 %v301, %v302
        %v304 = vrot.slane %v303, 1
        %v305 = vadd.f32 %v303, %v304
        %v306 = vadd.f32 %v121, %v137
        %v307 = vadd.f32 %v306, %v153
        %v308 = vadd.f32 %v307, %v169
        %v309 = vadd.f32 %v308, %v185
        %v310 = vadd.f32 %v309, %v201
        %v311 = vsel %vm232, %v217, 0.0
        %v312 = vadd.f32 %v310, %v311
        %v313 = vrot.slane %v312, 4
        %v314 = vadd.f32 %v312, %v313
        %v315 = vrot.slane %v314, 2
        %v316 = vadd.f32 %v314, %v315
        %v317 = vrot.slane %v316, 1
        %v318 = vadd.f32 %v316, %v317
        %v319 = vadd.f32 %v122, %v138
        %v320 = vadd.f32 %v319, %v154
        %v321 = vadd.f32 %v320, %v170
        %v322 = vadd.f32 %v321, %v186
        %v323 = vadd.f32 %v322, %v202
        %v324 = vsel %vm232, %v218, 0.0
        %v325 = vadd.f32 %v323, %v324
        %v326 = vrot.slane %v325, 4
        %v327 = vadd.f32 %v325, %v326
        %v328 = vrot.slane %v327, 2
        %v329 = vadd.f32 %v327, %v328
        %v330 = vrot.slane %v329, 1
        %v331 = vadd.f32 %v329, %v330
        %v332 = vadd.f32 %v123, %v139
        %v333 = vadd.f32 %v332, %v155
        %v334 = vadd.f32 %v333, %v171
        %v335 = vadd.f32 %v334, %v187
        %v336 = vadd.f32 %v335, %v203
        %v337 = vsel %vm232, %v219, 0.0
        %v338 = vadd.f32 %v336, %v337
        %v339 = vrot.slane %v338, 4
        %v340 = vadd.f32 %v338, %v339
        %v341 = vrot.slane %v340, 2
        %v342 = vadd.f32 %v340, %v341
        %v343 = vrot.slane %v342, 1
        %v344 = vadd.f32 %v342, %v343
        %v345 = vadd.f32 %v124, %v140
        %v346 = vadd.f32 %v345, %v156
        %v347 = vadd.f32 %v346, %v172
        %v348 = vadd.f32 %v347, %v188
        %v349 = vadd.f32 %v348, %v204
        %v350 = vsel %vm232, %v220, 0.0
        %v351 = vadd.f32 %v349, %v350
        %v352 = vrot.slane %v351, 4
        %v353 = vadd.f32 %v351, %v352
        %v354 = vrot.slane %v353, 2
        %v355 = vadd.f32 %v353, %v354
        %v356 = vrot.slane %v355, 1
        %v357 = vadd.f32 %v355, %v356
        %v358 = vadd.f32 %v125, %v141
        %v359 = vadd.f32 %v358, %v157
        %v360 = vadd.f32 %v359, %v173
        %v361 = vadd.f32 %v360, %v189
        %v362 = vadd.f32 %v361, %v205
        %v363 = vsel %vm232, %v221, 0.0
        %v364 = vadd.f32 %v362, %v363
        %v365 = vrot.slane %v364, 4
        %v366 = vadd.f32 %v364, %v365
        %v367 = vrot.slane %v366, 2
        %v368 = vadd.f32 %v366, %v367
        %v369 = vrot.slane %v368, 1
        %v370 = vadd.f32 %v368, %v369
        %v371 = vadd.f32 %v126, %v142
        %v372 = vadd.f32 %v371, %v158
        %v373 = vadd.f32 %v372, %v174
        %v374 = vadd.f32 %v373, %v190
        %v375 = vadd.f32 %v374, %v206
        %v376 = vsel %vm232, %v222, 0.0
        %v377 = vadd.f32 %v375, %v376
        %v378 = vrot.slane %v377, 4
        %v379 = vadd.f32 %v377, %v378
        %v380 = vrot.slane %v379, 2
        %v381 = vadd.f32 %v379, %v380
        %v382 = vrot.slane %v381, 1
        %v383 = vadd.f32 %v381, %v382
        %v384 = vadd.f32 %v127, %v143
        %v385 = vadd.f32 %v384, %v159
        %v386 = vadd.f32 %v385, %v175
        %v387 = vadd.f32 %v386, %v191
        %v388 = vadd.f32 %v387, %v207
        %v389 = vsel %vm232, %v223, 0.0
        %v390 = vadd.f32 %v388, %v389
        %v391 = vrot.slane %v390, 4
        %v392 = vadd.f32 %v390, %v391
        %v393 = vrot.slane %v392, 2
        %v394 = vadd.f32 %v392, %v393
        %v395 = vrot.slane %v394, 1
        %v396 = vadd.f32 %v394, %v395
        %v397 = vadd.f32 %v128, %v144
        %v398 = vadd.f32 %v397, %v160
        %v399 = vadd.f32 %v398, %v176
        %v400 = vadd.f32 %v399, %v192
        %v401 = vadd.f32 %v400, %v208
        %v402 = vsel %vm232, %v224, 0.0
        %v403 = vadd.f32 %v401, %v402
        %v404 = vrot.slane %v403, 4
        %v405 = vadd.f32 %v403, %v404
        %v406 = vrot.slane %v405, 2
        %v407 = vadd.f32 %v405, %v406
        %v408 = vrot.slane %v407, 1
        %v409 = vadd.f32 %v407, %v408
        %v410 = vadd.f32 %v129, %v145
        %v411 = vadd.f32 %v410, %v161
        %v412 = vadd.f32 %v411, %v177
        %v413 = vadd.f32 %v412, %v193
        %v414 = vadd.f32 %v413, %v209
        %v415 = vsel %vm232, %v225, 0.0
        %v416 = vadd.f32 %v414, %v415
        %v417 = vrot.slane %v416, 4
        %v418 = vadd.f32 %v416, %v417
        %v419 = vrot.slane %v418, 2
        %v420 = vadd.f32 %v418, %v419
        %v421 = vrot.slane %v420, 1
        %v422 = vadd.f32 %v420, %v421
        %v423 = vadd.f32 %v130, %v146
        %v424 = vadd.f32 %v423, %v162
        %v425 = vadd.f32 %v424, %v178
        %v426 = vadd.f32 %v425, %v194
        %v427 = vadd.f32 %v426, %v210
        %v428 = vsel %vm232, %v226, 0.0
        %v429 = vadd.f32 %v427, %v428
        %v430 = vrot.slane %v429, 4
        %v431 = vadd.f32 %v429, %v430
        %v432 = vrot.slane %v431, 2
        %v433 = vadd.f32 %v431, %v432
        %v434 = vrot.slane %v433, 1
        %v435 = vadd.f32 %v433, %v434
        %v436 = vmul.f32 %v240, 0.020408163
        %v437 = vmul.f32 %v253, 0.020408163
        %v438 = vmul.f32 %v266, 0.020408163
        %v439 = vmul.f32 %v279, 0.020408163
        %v440 = vmul.f32 %v292, 0.020408163
        %v441 = vmul.f32 %v305, 0.020408163
        %v442 = vmul.f32 %v318, 0.020408163
        %v443 = vmul.f32 %v331, 0.020408163
        %v444 = vmul.f32 %v344, 0.020408163
        %v445 = vmul.f32 %v357, 0.020408163
        %v446 = vmul.f32 %v370, 0.020408163
        %v447 = vmul.f32 %v383, 0.020408163
        %v448 = vmul.f32 %v396, 0.020408163
        %v449 = vmul.f32 %v409, 0.020408163
        %v450 = vmul.f32 %v422, 0.020408163
        %v451 = vmul.f32 %v435, 0.020408163
        %v468 = vcombine.low %v436, %v437
        %v469 = vcombine.low %v438, %v439
        %v470 = vcombine.low %v440, %v441
        %v471 = vcombine.low %v442, %v443
        %v473 = vunpack.c.l.s4 1966171168
        %v474 = vunpack.c.0.s8 %v473
        %v475 = vlaneseq
        %v476 = vshrl.u32 %v475, 7
        %v477 = vsub.s32 %v474, %v476
        %v478 = vrot.slane %v468, %v477
        %v480 = vunpack.c.l.s4 1966171168
        %v481 = vunpack.c.0.s8 %v480
        %v482 = vlaneseq
        %v483 = vshrl.u32 %v482, 7
        %v484 = vsub.s32 %v481, %v483
        %v485 = vrot.slane %v469, %v484
        %v487 = vunpack.c.l.s4 1966171168
        %v488 = vunpack.c.0.s8 %v487
        %v489 = vlaneseq
        %v490 = vshrl.u32 %v489, 7
        %v491 = vsub.s32 %v488, %v490
        %v492 = vrot.slane %v470, %v491
        %v494 = vunpack.c.l.s4 1966171168
        %v495 = vunpack.c.0.s8 %v494
        %v496 = vlaneseq
        %v497 = vshrl.u32 %v496, 7
        %v498 = vsub.s32 %v495, %v497
        %v499 = vrot.slane %v471, %v498
        %v500 = vcombine.low %v478, %v485
        %v501 = vcombine.low %v492, %v499
        %v503 = vunpack.c.l.s4 1966171168
        %v504 = vunpack.c.0.s8 %v503
        %v505 = vlaneseq
        %v506 = vshrl.u32 %v505, 7
        %v507 = vsub.s32 %v504, %v506
        %v508 = vrot.slane %v500, %v507
        %v510 = vunpack.c.l.s4 1966171168
        %v511 = vunpack.c.0.s8 %v510
        %v512 = vlaneseq
        %v513 = vshrl.u32 %v512, 7
        %v514 = vsub.s32 %v511, %v513
        %v515 = vrot.slane %v501, %v514
        %v516 = vcombine.low %v508, %v515
        %v517 = vcombine.low %v444, %v445
        %v518 = vcombine.low %v446, %v447
        %v519 = vcombine.low %v448, %v449
        %v520 = vcombine.low %v450, %v451
        %v522 = vunpack.c.l.s4 1966171168
        %v523 = vunpack.c.0.s8 %v522
        %v524 = vlaneseq
        %v525 = vshrl.u32 %v524, 7
        %v526 = vsub.s32 %v523, %v525
        %v527 = vrot.slane %v517, %v526
        %v529 = vunpack.c.l.s4 1966171168
        %v530 = vunpack.c.0.s8 %v529
        %v531 = vlaneseq
        %v532 = vshrl.u32 %v531, 7
        %v533 = vsub.s32 %v530, %v532
        %v534 = vrot.slane %v518, %v533
        %v536 = vunpack.c.l.s4 1966171168
        %v537 = vunpack.c.0.s8 %v536
        %v538 = vlaneseq
        %v539 = vshrl.u32 %v538, 7
        %v540 = vsub.s32 %v537, %v539
        %v541 = vrot.slane %v519, %v540
        %v543 = vunpack.c.l.s4 1966171168
        %v544 = vunpack.c.0.s8 %v543
        %v545 = vlaneseq
        %v546 = vshrl.u32 %v545, 7
        %v547 = vsub.s32 %v544, %v546
        %v548 = vrot.slane %v520, %v547
        %v549 = vcombine.low %v527, %v534
        %v550 = vcombine.low %v541, %v548
        %v552 = vunpack.c.l.s4 1966171168
        %v553 = vunpack.c.0.s8 %v552
        %v554 = vlaneseq
        %v555 = vshrl.u32 %v554, 7
        %v556 = vsub.s32 %v553, %v555
        %v557 = vrot.slane %v549, %v556
        %v559 = vunpack.c.l.s4 1966171168
        %v560 = vunpack.c.0.s8 %v559
        %v561 = vlaneseq
        %v562 = vshrl.u32 %v561, 7
        %v563 = vsub.s32 %v560, %v562
        %v564 = vrot.slane %v550, %v563
        %v565 = vcombine.low %v557, %v564
        %568 = vst [vmem:[%s109] sm:$0xff] %v516
        %569 = vst [vmem:[%s109 + $0x8] sm:$0xff] %v565
        %s570 = sand.u32 %s49, 1
        %s571 = scalar_lea.sflag [#allocation3], %s570
        %s572 = sand.u32 %s49, 1
        %s573 = smul.addr %s572, 16
        %s574 = scalar_lea.vmem [#allocation2], %s573
        // Predicated region
        $region25: #{tpu_custom_call.1} parent=23 // pred_check
          %p575 = pneg %p59
        $region26: #{tpu_custom_call.1} parent=23 // pred_check_branch
          %577 = sbr.rel (%p575) target = $region28
        $region27: #{tpu_custom_call.1} parent=23 // pred_region
          %s579 = ssub.s32 256, 256
          %580 = vsyncadd %s571, %s579
          %s581 = smul.addr %s15, 16
          %s582 = smul.addr %s581, 16
          %s583 = scalar_lea.hbm %s1, %s582
          %s585 = sshll.u32 %s574, 4
          %s586 = int_to_ptr.vmem [resolvable:$true] %s585
          %588 = dma.vmem_to_hbm [thread:$0]  %s586, 256, %s583, %s571
        $region28: #{tpu_custom_call.1} parent=23 // pred_fallthru
          _
      $region24: #{tpu_custom_call.1} parent=5 // pred_fallthru
        _
      %p589 = scmp.le.s32.totalorder 2, %s10
      // Predicated region
      $region29: #{tpu_custom_call.1} parent=5 // pred_check
        %p590 = pneg %p589
      $region30: #{tpu_custom_call.1} parent=5 // pred_check_branch
        %592 = sbr.rel (%p590) target = $region32
      $region31: #{tpu_custom_call.1} parent=5 // pred_region
        %s593 = ssub.s32 %s10, 2
        // Predicated region
        $region33: #{tpu_custom_call.1} parent=31 // pred_check
          %p594 = pneg %p65
        $region34: #{tpu_custom_call.1} parent=31 // pred_check_branch
          %596 = sbr.rel (%p594) target = $region36
        $region35: #{tpu_custom_call.1} parent=31 // pred_region
          %s597 = sand.u32 %s50, 1
          %s598 = scalar_lea.sflag [#allocation3], %s597
          %s599 = sand.u32 %s50, 1
          %s600 = smul.addr %s599, 16
          %s601 = scalar_lea.vmem [#allocation2], %s600
          %602 = dma.done %s598, 256
        $region36: #{tpu_custom_call.1} parent=31 // pred_fallthru
          _
      $region32: #{tpu_custom_call.1} parent=5 // pred_fallthru
        _
    $region6: #{tpu_custom_call.1} parent=1 // loop_footer
      %s14 = sadd.s32 1, %s10
    $region7: #{tpu_custom_call.1} parent=1 // loop_footer_branch
      %9 = sbr.rel target = $region3
    $region8: #{tpu_custom_call.1} parent=1 // loop_exit
      _
    %603 = vsyncpa [#allocation3], 1
    %s604 = scalar_lea.sflag [#allocation3], 1
    %605 = vsyncpa %s604, 1

</llo_original>
